<compile_context>
chip_gen: v5e
topology: v5e:2x2
jax: 0.10.0
libtpu: 0.0.40
codegen_flags: <defaults>
</compile_context>

<pallas_src>
import math
import functools

import jax
import jax.numpy as jnp
from jax import lax
from jax.experimental import pallas as pl
from jax.experimental.pallas import tpu as pltpu

# ---- module-level constants (stand-ins for the original codebase globals) ----
PAD = 0
MAX_SEQ_SIZE = 127           # -> sinusoidal table has MAX_SEQ_SIZE + PAD + 1 = 128 rows
N_VOCAB = 64
N_EMBED = 128
EMB_DROPOUT = 0.0            # TODO(synk): dropout p>0 (training mode) not implemented; p=0 => identity


# ----------------------------- parameter setup -------------------------------
def init_word_embedding(key, n_vocab, n_embed, padding_idx):
    """nn.Embedding weight: normal(0, n_embed**-0.5), row PAD zeroed."""
    w = jax.random.normal(key, (n_vocab, n_embed), dtype=jnp.float32) * (n_embed ** -0.5)
    w = w.at[padding_idx].set(0.0)
    return w


def sinusoidal_embedding(num_embeddings, embedding_dim, padding_idx):
    """Matches SinusoidalPositionalEmbedding.get_embedding (tensor2tensor style)."""
    half_dim = embedding_dim // 2
    emb = math.log(10000.0) / (half_dim - 1)
    inv = jnp.exp(jnp.arange(half_dim, dtype=jnp.float32) * -emb)
    scaled = jnp.arange(num_embeddings, dtype=jnp.float32)[:, None] * inv[None, :]
    table = jnp.concatenate([jnp.sin(scaled), jnp.cos(scaled)], axis=1)
    if embedding_dim % 2 == 1:
        table = jnp.concatenate([table, jnp.zeros((num_embeddings, 1), jnp.float32)], axis=1)
    table = table.at[padding_idx].set(0.0)
    return table


# --------------------------------- kernels ------------------------------------
def _word_pos_emb_kernel(ids_ref, we_ref, pe_ref, *out_refs, padding_idx, scale, emit_w):
    """One grid step over a (TB, S) block of whole sequences.

    ids_ref : (TB, S, 1) int32
    we_ref  : (V, E)     f32   VMEM-resident vocab table
    pe_ref  : (S, E)     f32   VMEM-resident positional slab spe[PAD+1 : PAD+1+S]
    out_refs: (wp,) or (w, wp), each (TB, S, E)
    """
    ids = ids_ref[...]                                    # (TB, S, 1)
    tb, s, _ = ids.shape
    v, e = we_ref.shape
    tn = tb * s

    # Word-embedding gather as one-hot(ids) @ table on the MXU (vocab fits VMEM).
    # Out-of-range ids give an all-zero row (reference gather behavior is undefined
    # for invalid ids anyway).
    ids_flat = ids.reshape(tn, 1)                         # S multiple of 8 -> free shape cast
    onehot = (ids_flat == lax.broadcasted_iota(jnp.int32, (tn, v), 1)).astype(jnp.float32)
    w_emb = jnp.dot(onehot, we_ref[...],
                    preferred_element_type=jnp.float32).reshape(tb, s, e)   # (TB,S,E)

    # Positions are padding_idx+1+col for non-pad tokens, padding_idx (zero row)
    # for pads.  Blocks hold whole sequences, so the positional contribution is
    # just the (S, E) slab broadcast over TB and masked where ids == PAD.
    p_emb = jnp.where(ids != padding_idx, pe_ref[...][None, :, :], 0.0)
    wp_emb = scale * w_emb + p_emb                        # dropout p=0 => identity

    if emit_w:
        w_out_ref, wp_out_ref = out_refs
        w_out_ref[...] = w_emb.astype(w_out_ref.dtype)
        wp_out_ref[...] = wp_emb.astype(wp_out_ref.dtype)
    else:
        (wp_out_ref,) = out_refs
        wp_out_ref[...] = wp_emb.astype(wp_out_ref.dtype)


def _word_emb_kernel(ids_ref, we_ref, w_out_ref):
    """position_encoding=False path: only the word-embedding lookup/store."""
    ids = ids_ref[...]                                    # (TB, S, 1)
    tb, s, _ = ids.shape
    v, e = we_ref.shape
    tn = tb * s
    ids_flat = ids.reshape(tn, 1)
    onehot = (ids_flat == lax.broadcasted_iota(jnp.int32, (tn, v), 1)).astype(jnp.float32)
    w_emb = jnp.dot(onehot, we_ref[...], preferred_element_type=jnp.float32).reshape(tb, s, e)
    w_out_ref[...] = w_emb.astype(w_out_ref.dtype)


# -------------------------------- wrapper -------------------------------------
def _choose_batch_tile(b, s, target_rows):
    """Sequences per block.

    Any divisor of b is legal (output block's trailing dims are the full (S, E)),
    so there is no single-giant-block fallback.  Prefer the largest tile whose
    row count (tb*s) fits target_rows while still leaving >= 2 grid steps so the
    'parallel' grid axis can shard across TensorCores (v7x megacore).
    """
    tb_max = max(1, target_rows // max(1, s))
    divisors = [d for d in range(1, b + 1) if b % d == 0 and d <= tb_max]
    if not divisors:
        return 1
    parallel_ok = [d for d in divisors if b // d >= 2]
    return max(parallel_ok) if parallel_ok else max(divisors)


def word_embedding_forward(x, we_weight, spe_weight=None, *, padding_idx=PAD,
                           position_encoding=True, block_rows=2048,
                           need_w_emb=True, out_dtype=jnp.float32):
    """x: int [B, S] token ids.

    Returns (x_w_emb, x_wp_emb), each [B, S, E] in `out_dtype` (matches the
    PyTorch module).  If need_w_emb=False (position_encoding=True only), returns
    (None, x_wp_emb) and skips the duplicate HBM store of the raw word embedding.
    """
    b, s = x.shape
    n_vocab, n_embed = we_weight.shape

    # Pad S up to a sublane multiple with PAD tokens (zero rows, masked positions);
    # padded columns are sliced off at the end.  Keeps in-kernel reshapes free.
    s_pad = ((s + 7) // 8) * 8
    x_ids = x.astype(jnp.int32)
    if s_pad != s:
        x_ids = jnp.pad(x_ids, ((0, 0), (0, s_pad - s)), constant_values=padding_idx)
    ids3 = x_ids.reshape(b, s_pad, 1)

    tb = _choose_batch_tile(b, s_pad, block_rows)
    grid = (b // tb,)

    n_out = 1 if (not position_encoding or not need_w_emb) else 2
    itemsize = jnp.dtype(out_dtype).itemsize
    out_block_bytes = tb * s_pad * n_embed * itemsize
    # Right-size the VMEM limit: double-buffered out/ids blocks + resident tables
    # + headroom for in-kernel f32 temporaries (one-hot, w_emb, wp_emb).
    work = (2 * n_out * out_block_bytes
            + 2 * tb * s_pad * 4
            + n_vocab * n_embed * 4
            + s_pad * n_embed * 4
            + 4 * tb * s_pad * n_embed * 4)
    vmem_limit = int(min(32 * 1024 * 1024, max(8 * 1024 * 1024, work * 5 // 4)))

    cparams = pltpu.CompilerParams(
        dimension_semantics=("parallel",),        # shard blocks across TCs on v7x
        vmem_limit_bytes=vmem_limit,
    )

    ids_spec = pl.BlockSpec((tb, s_pad, 1), lambda i: (i, 0, 0))
    we_spec = pl.BlockSpec((n_vocab, n_embed), lambda i: (0, 0))       # VMEM-resident
    out_spec = pl.BlockSpec((tb, s_pad, n_embed), lambda i: (i, 0, 0))
    out_sds = jax.ShapeDtypeStruct((b, s_pad, n_embed), out_dtype)

    if not position_encoding:
        w_emb = pl.pallas_call(
            _word_emb_kernel,
            out_shape=out_sds,
            grid=grid,
            in_specs=[ids_spec, we_spec],
            out_specs=out_spec,
            compiler_params=cparams,
        )(ids3, we_weight)
        if s_pad != s:
            w_emb = w_emb[:, :s, :]
        return w_emb, w_emb                        # dropout p=0 => identity

    # Mimic the PyTorch module: regrow the sinusoidal table if too short.
    required = padding_idx + 1 + s_pad
    if spe_weight is None or spe_weight.shape[0] < required:
        spe_weight = sinusoidal_embedding(required, n_embed, padding_idx)

    # Single (S, E) positional slab, constant index_map -> read once, VMEM-resident.
    pe_slab = spe_weight[padding_idx + 1: padding_idx + 1 + s_pad, :]   # (S_pad, E)
    pe_spec = pl.BlockSpec((s_pad, n_embed), lambda i: (0, 0))

    kernel = functools.partial(_word_pos_emb_kernel,
                               padding_idx=padding_idx,
                               scale=math.sqrt(n_embed),
                               emit_w=need_w_emb)

    if need_w_emb:
        w_emb, wp_emb = pl.pallas_call(
            kernel,
            out_shape=(out_sds, out_sds),
            grid=grid,
            in_specs=[ids_spec, we_spec, pe_spec],
            out_specs=(out_spec, out_spec),
            compiler_params=cparams,
        )(ids3, we_weight, pe_slab)
        if s_pad != s:
            w_emb = w_emb[:, :s, :]
            wp_emb = wp_emb[:, :s, :]
        return w_emb, wp_emb

    wp_emb = pl.pallas_call(
        kernel,
        out_shape=out_sds,
        grid=grid,
        in_specs=[ids_spec, we_spec, pe_spec],
        out_specs=out_spec,
        compiler_params=cparams,
    )(ids3, we_weight, pe_slab)
    if s_pad != s:
        wp_emb = wp_emb[:, :s, :]
    return None, wp_emb


# ------------------------------- reference ------------------------------------
def reference_forward(x, we_weight, spe_weight, *, padding_idx=PAD, position_encoding=True):
    w_emb = we_weight[x]                                  # [B, S, E]
    if not position_encoding:
        return w_emb, w_emb
    s = x.shape[1]
    pos = jnp.where(x != padding_idx,
                    padding_idx + 1 + jnp.arange(s, dtype=jnp.int32)[None, :],
                    padding_idx)
    p_emb = spe_weight[pos]
    wp_emb = math.sqrt(we_weight.shape[1]) * w_emb + p_emb
    return w_emb, wp_emb


if __name__ == "__main__":
    key = jax.random.PRNGKey(0)
    k_w, k_x1, k_x2, k_x3 = jax.random.split(key, 4)

    we_weight = init_word_embedding(k_w, N_VOCAB, N_EMBED, PAD)
    spe_weight = sinusoidal_embedding(MAX_SEQ_SIZE + PAD + 1, N_EMBED, PAD)

    # --- small config (B=2, S=8): grid=(2,) with 1 sequence per block ---
    B, S = 2, 8
    x = jax.random.randint(k_x1, (B, S), 0, N_VOCAB, dtype=jnp.int32)
    x = x.at[0, S - 1].set(PAD)
    x = x.at[1, S - 2].set(PAD)

    w_emb, wp_emb = word_embedding_forward(x, we_weight, spe_weight,
                                           padding_idx=PAD, position_encoding=True)
    jax.block_until_ready((w_emb, wp_emb))
    w_ref, wp_ref = reference_forward(x, we_weight, spe_weight, padding_idx=PAD)
    assert jnp.allclose(w_emb, w_ref, atol=1e-5), "word embedding mismatch (small)"
    assert jnp.allclose(wp_emb, wp_ref, atol=1e-5), "word+pos embedding mismatch (small)"

    # --- larger config exercising a multi-block grid ---
    B2, S2 = 8, 64
    x2 = jax.random.randint(k_x2, (B2, S2), 0, N_VOCAB, dtype=jnp.int32)
    x2 = x2.at[:, -3:].set(PAD)
    w2, wp2 = word_embedding_forward(x2, we_weight, spe_weight, padding_idx=PAD,
                                     position_encoding=True, block_rows=256)
    jax.block_until_ready((w2, wp2))
    w2_ref, wp2_ref = reference_forward(x2, we_weight, spe_weight, padding_idx=PAD)
    assert jnp.allclose(w2, w2_ref, atol=1e-5), "word embedding mismatch (grid)"
    assert jnp.allclose(wp2, wp2_ref, atol=1e-5), "word+pos embedding mismatch (grid)"

    # --- wp-only path (halved HBM store traffic) ---
    _, wp_only = word_embedding_forward(x2, we_weight, spe_weight, padding_idx=PAD,
                                        position_encoding=True, need_w_emb=False)
    jax.block_until_ready(wp_only)
    assert jnp.allclose(wp_only, wp2_ref, atol=1e-5), "wp-only mismatch"

    # --- bf16 output path (store bytes halved again; compute stays f32) ---
    _, wp_bf16 = word_embedding_forward(x2, we_weight, spe_weight, padding_idx=PAD,
                                        position_encoding=True, need_w_emb=False,
                                        out_dtype=jnp.bfloat16)
    jax.block_until_ready(wp_bf16)
    assert jnp.allclose(wp_bf16.astype(jnp.float32), wp2_ref, atol=5e-2), "bf16 wp mismatch"

    # --- non-multiple-of-8 sequence length (internal padding + slice) ---
    B3, S3 = 2, 5
    x3 = jax.random.randint(k_x3, (B3, S3), 0, N_VOCAB, dtype=jnp.int32)
    x3 = x3.at[1, -1].set(PAD)
    w3, wp3 = word_embedding_forward(x3, we_weight, spe_weight, padding_idx=PAD,
                                     position_encoding=True)
    jax.block_until_ready((w3, wp3))
    w3_ref, wp3_ref = reference_forward(x3, we_weight, spe_weight, padding_idx=PAD)
    assert jnp.allclose(w3, w3_ref, atol=1e-5), "word embedding mismatch (odd S)"
    assert jnp.allclose(wp3, wp3_ref, atol=1e-5), "word+pos embedding mismatch (odd S)"

    # --- position_encoding=False path (single-output kernel, wp == w) ---
    w4, wp4 = word_embedding_forward(x, we_weight, None, padding_idx=PAD,
                                     position_encoding=False)
    jax.block_until_ready((w4, wp4))
    assert jnp.allclose(w4, w_ref, atol=1e-5), "word embedding mismatch (no-pos)"
    assert jnp.allclose(wp4, w_ref, atol=1e-5), "wp==w mismatch (no-pos)"

    print("KERNEL_OK")
</pallas_src>

<mosaic_0001>
module attributes {stable_mosaic.version = 11 : i64} {
  func.func @_word_pos_emb_kernel(%arg0: i32, %arg1: memref<1x8x1xi32, #tpu.memory_space<vmem>>, %arg2: memref<64x128xf32, #tpu.memory_space<vmem>>, %arg3: memref<8x128xf32, #tpu.memory_space<vmem>>, %arg4: memref<1x8x128xf32, #tpu.memory_space<vmem>>, %arg5: memref<1x8x128xf32, #tpu.memory_space<vmem>>) attributes {dimension_semantics = [#tpu.dimension_semantics<parallel>], iteration_bounds = array<i64: 2>, scalar_prefetch = 0 : i64, scratch_operands = 0 : i64, tpu.core_type = #tpu.core_type<tc>, window_params = [{transform_indices = @transform_0, window_bounds = array<i64: 1, 8, 1>}, {pipeline_mode = #tpu.pipeline_mode<synchronous>, transform_indices = @transform_1, window_bounds = array<i64: 64, 128>}, {pipeline_mode = #tpu.pipeline_mode<synchronous>, transform_indices = @transform_2, window_bounds = array<i64: 8, 128>}, {transform_indices = @transform_3, window_bounds = array<i64: 1, 8, 128>}, {transform_indices = @transform_4, window_bounds = array<i64: 1, 8, 128>}]} {
    %c0 = arith.constant 0 : index
    %c0_0 = arith.constant 0 : index
    %c0_1 = arith.constant 0 : index
    %0 = vector.load %arg1[%c0, %c0_0, %c0_1] : memref<1x8x1xi32, #tpu.memory_space<vmem>>, vector<1x8x1xi32>
    %1 = vector.shape_cast %0 : vector<1x8x1xi32> to vector<8x1xi32>
    %2 = tpu.iota {dimensions = array<i32: 1>} : vector<8x64xi32>
    %3 = vector.broadcast %1 : vector<8x1xi32> to vector<8x64xi32>
    %4 = arith.cmpi eq, %3, %2 : vector<8x64xi32>
    %5 = arith.extui %4 : vector<8x64xi1> to vector<8x64xi32>
    %6 = arith.sitofp %5 : vector<8x64xi32> to vector<8x64xf32>
    %c0_2 = arith.constant 0 : index
    %c0_3 = arith.constant 0 : index
    %7 = vector.load %arg2[%c0_2, %c0_3] : memref<64x128xf32, #tpu.memory_space<vmem>>, vector<64x128xf32>
    %cst = arith.constant dense<0.000000e+00> : vector<8x128xf32>
    %8 = tpu.matmul %6, %7, %cst {dimension_numbers = #tpu.dot_dimension_numbers<[1], [0], [0], [1], [0, 0, 1, 1], [], []>} : vector<8x64xf32>, vector<64x128xf32>, vector<8x128xf32> -> vector<8x128xf32>
    %9 = vector.shape_cast %8 : vector<8x128xf32> to vector<1x8x128xf32>
    %c0_i32 = arith.constant 0 : i32
    %10 = vector.broadcast %c0_i32 : i32 to vector<1x8x1xi32>
    %11 = arith.cmpi ne, %0, %10 : vector<1x8x1xi32>
    %c0_4 = arith.constant 0 : index
    %c0_5 = arith.constant 0 : index
    %12 = vector.load %arg3[%c0_4, %c0_5] : memref<8x128xf32, #tpu.memory_space<vmem>>, vector<8x128xf32>
    %13 = vector.shape_cast %12 : vector<8x128xf32> to vector<1x8x128xf32>
    %cst_6 = arith.constant 0.000000e+00 : f32
    %14 = vector.shape_cast %11 : vector<1x8x1xi1> to vector<1x8x1xi1>
    %15 = vector.broadcast %14 : vector<1x8x1xi1> to vector<1x8x128xi1>
    %16 = vector.broadcast %cst_6 : f32 to vector<1x8x128xf32>
    %17 = arith.select %15, %13, %16 : vector<1x8x128xi1>, vector<1x8x128xf32>
    %cst_7 = arith.constant 11.3137083 : f32
    %18 = vector.broadcast %cst_7 : f32 to vector<1x8x128xf32>
    %19 = arith.mulf %18, %9 : vector<1x8x128xf32>
    %20 = arith.addf %19, %17 : vector<1x8x128xf32>
    %c0_8 = arith.constant 0 : index
    %c0_9 = arith.constant 0 : index
    %c0_10 = arith.constant 0 : index
    %21 = vector.load %arg4[%c0_8, %c0_9, %c0_10] : memref<1x8x128xf32, #tpu.memory_space<vmem>>, vector<1x8x128xf32>
    tpu.vector_store %arg4[%c0_8, %c0_9, %c0_10], %9 {strides = array<i32>} : memref<1x8x128xf32, #tpu.memory_space<vmem>>, vector<1x8x128xf32>,
    %c0_11 = arith.constant 0 : index
    %c0_12 = arith.constant 0 : index
    %c0_13 = arith.constant 0 : index
    %22 = vector.load %arg5[%c0_11, %c0_12, %c0_13] : memref<1x8x128xf32, #tpu.memory_space<vmem>>, vector<1x8x128xf32>
    tpu.vector_store %arg5[%c0_11, %c0_12, %c0_13], %20 {strides = array<i32>} : memref<1x8x128xf32, #tpu.memory_space<vmem>>, vector<1x8x128xf32>,
    return
  }
  func.func @transform_0(%arg0: i32) -> (i32, i32, i32) {
    %c0_i32 = arith.constant 0 : i32
    %c0_i32_0 = arith.constant 0 : i32
    %c0_i32_1 = arith.constant 0 : i32
    return %arg0, %c0_i32, %c0_i32_0 : i32, i32, i32
  }
  func.func @transform_1(%arg0: i32) -> (i32, i32) {
    %c0_i32 = arith.constant 0 : i32
    %c0_i32_0 = arith.constant 0 : i32
    %c0_i32_1 = arith.constant 0 : i32
    return %c0_i32, %c0_i32_0 : i32, i32
  }
  func.func @transform_2(%arg0: i32) -> (i32, i32) {
    %c0_i32 = arith.constant 0 : i32
    %c0_i32_0 = arith.constant 0 : i32
    %c0_i32_1 = arith.constant 0 : i32
    return %c0_i32, %c0_i32_0 : i32, i32
  }
  func.func @transform_3(%arg0: i32) -> (i32, i32, i32) {
    %c0_i32 = arith.constant 0 : i32
    %c0_i32_0 = arith.constant 0 : i32
    %c0_i32_1 = arith.constant 0 : i32
    return %arg0, %c0_i32, %c0_i32_0 : i32, i32, i32
  }
  func.func @transform_4(%arg0: i32) -> (i32, i32, i32) {
    %c0_i32 = arith.constant 0 : i32
    %c0_i32_0 = arith.constant 0 : i32
    %c0_i32_1 = arith.constant 0 : i32
    return %arg0, %c0_i32, %c0_i32_0 : i32, i32, i32
  }
}

</mosaic_0001>

<llo_original>
// kernel: tpu_custom_call.1
$region0: #{tpu_custom_call.1}
  #allocation0 [shape = 'u32[]', space=smem, size = 0x4, offset = 0x4, fixed_abs, tag = 'smem constant byte address 0x4 - core index']
  #allocation1 [shape = 'u32[72,128]{1,0:T(1,128)}', space=vmem, size = 0x9000, scoped, tag = 'internal scratch']
  %s0 = inlined_call_operand.vmem [shape: s32[2,8,1], index: 0, kind: input, shape index: {}]
  %s1 = inlined_call_operand.hbm [shape: f32[64,128], index: 1, kind: input, shape index: {}]
  %s2 = inlined_call_operand.vmem [shape: f32[8,128], index: 2, kind: input, shape index: {}]
  %s3 = inlined_call_operand.hbm [shape: f32[2,8,128], index: 3, kind: output, shape index: {0}]
  %s4 = inlined_call_operand.hbm [shape: f32[2,8,128], index: 4, kind: output, shape index: {1}]
  %5 = xla_tuple %s3, %s4
  %s6 = sld [smem:[#allocation0]]
  $region57: #{tpu_custom_call.1} parent=0
    _
  %s8 = ssub.s32 1, %s6
  %s9 = scalar_select 0, %s8, %s6
  $region1: #{tpu_custom_call.1} parent=0
    #allocation2 [shape = 'u8[32768]{0}', space=vmem, size = 0x8000, scoped, tag = 'input window, operand 1, single buffered']
    #allocation3 [shape = 's32[2]{0}', space=sflag, size = 0x8, scoped, tag = 'scoped memory for tpu_custom_call.1']
    #allocation4 [shape = 's32[2]{0}', space=sflag, size = 0x8, scoped, tag = 'scoped memory for tpu_custom_call.1']
    #allocation5 [shape = 'u8[8192]{0}', space=vmem, size = 0x2000, scoped, tag = 'output window, operand 0']
    #allocation6 [shape = 'u8[8192]{0}', space=vmem, size = 0x2000, scoped, tag = 'output window, operand 1']
    #allocation7 [shape = 's32[2]{0}', space=sflag, size = 0x8, scoped, tag = 'scoped memory for tpu_custom_call.1']
    %10 = vsyncpa [#allocation3], 0
    %11 = vsyncpa [#allocation4], 0
    %s12 = scalar_lea.sflag [#allocation4], 1
    %13 = vsyncpa %s12, 0
    %14 = vsyncpa [#allocation7], 0
    %s15 = scalar_lea.sflag [#allocation7], 1
    %16 = vsyncpa %s15, 0
    loop: start=0, step=1, limit=4
    $region2: #{tpu_custom_call.1} parent=1 // loop_pre_header
      _
    $region3: #{tpu_custom_call.1} parent=1 // loop_header
      %s18 = sphi 0, %s22
      %p19 = scmp.ge.s32.totalorder %s18, 4
      %s28 = sphi 0, %s30
      %s31 = sphi 0, %s28
      %s32 = sphi 0, %s31
      %s48 = sphi 0, %s32
      %s52 = sphi 0, %s52
      %s54 = sphi 0, %s52
      %s55 = sphi 0, %s54
      %s69 = sphi 0, %s55
      %s73 = sphi 0, %s73
      %s75 = sphi 0, %s73
      %s76 = sphi 0, %s75
      %s90 = sphi 0, %s76
      %s96 = sphi 0, %s98
      %s99 = sphi 0, %s96
      %s100 = sphi 0, %s99
      %s116 = sphi 0, %s100
      %s122 = sphi 0, %s124
      %s125 = sphi 0, %s122
      %s126 = sphi 0, %s125
      %s142 = sphi 0, %s126
    $region4: #{tpu_custom_call.1} parent=1 // loop_header_branch
      %21 = sbr.rel (%p19) target = $region8
    $region5: #{tpu_custom_call.1} parent=1 // loop_body
      %s23 = ssub.s32 %s18, 1
      %s24 = ssub.s32 %s18, 2
      %s25 = sadd.s32 %s18, 1
      %s26 = ssub.s32 %s18, %s25
      %p27 = scmp.eq.s32.totalorder %s26, 0
      %s29 = sadd.s32 %s28, 1
      %s30 = scalar_select %p27, %s28, %s29
      %p33 = pneg %p27
      %p34 = scmp.eq.s32.totalorder %s18, 1
      %p35 = por %p33, %p34
      %p36 = scmp.ne.s32.totalorder %s28, %s31
      %p37 = scmp.eq.s32.totalorder %s18, 0
      %p38 = por %p36, %p37
      %p39 = scmp.ne.s32.totalorder %s28, %s31
      %p40 = scmp.eq.s32.totalorder %s23, 1
      %p41 = por %p39, %p40
      %p42 = scmp.ne.s32.totalorder %s31, %s32
      %p43 = scmp.eq.s32.totalorder %s23, 0
      %p44 = por %p42, %p43
      %p45 = scmp.ne.s32.totalorder %s31, %s32
      %p46 = scmp.eq.s32.totalorder %s24, 1
      %p47 = por %p45, %p46
      %p49 = scmp.ne.s32.totalorder %s32, %s48
      %p50 = scmp.eq.s32.totalorder %s24, 0
      %p51 = por %p49, %p50
      %s53 = sadd.s32 %s52, 1
      %p56 = scmp.eq.s32.totalorder %s18, 1
      %p57 = scmp.ne.s32.totalorder %s52, %s54
      %p58 = scmp.eq.s32.totalorder %s18, 0
      %p59 = por %p57, %p58
      %p60 = scmp.ne.s32.totalorder %s52, %s54
      %p61 = scmp.eq.s32.totalorder %s23, 1
      %p62 = por %p60, %p61
      %p63 = scmp.ne.s32.totalorder %s54, %s55
      %p64 = scmp.eq.s32.totalorder %s23, 0
      %p65 = por %p63, %p64
      %p66 = scmp.ne.s32.totalorder %s54, %s55
      %p67 = scmp.eq.s32.totalorder %s24, 1
      %p68 = por %p66, %p67
      %p70 = scmp.ne.s32.totalorder %s55, %s69
      %p71 = scmp.eq.s32.totalorder %s24, 0
      %p72 = por %p70, %p71
      %s74 = sadd.s32 %s73, 1
      %p77 = scmp.eq.s32.totalorder %s18, 1
      %p78 = scmp.ne.s32.totalorder %s73, %s75
      %p79 = scmp.eq.s32.totalorder %s18, 0
      %p80 = por %p78, %p79
      %p81 = scmp.ne.s32.totalorder %s73, %s75
      %p82 = scmp.eq.s32.totalorder %s23, 1
      %p83 = por %p81, %p82
      %p84 = scmp.ne.s32.totalorder %s75, %s76
      %p85 = scmp.eq.s32.totalorder %s23, 0
      %p86 = por %p84, %p85
      %p87 = scmp.ne.s32.totalorder %s75, %s76
      %p88 = scmp.eq.s32.totalorder %s24, 1
      %p89 = por %p87, %p88
      %p91 = scmp.ne.s32.totalorder %s76, %s90
      %p92 = scmp.eq.s32.totalorder %s24, 0
      %p93 = por %p91, %p92
      %s94 = ssub.s32 %s18, %s25
      %p95 = scmp.eq.s32.totalorder %s94, 0
      %s97 = sadd.s32 %s96, 1
      %s98 = scalar_select %p95, %s96, %s97
      %p101 = pneg %p95
      %p102 = scmp.eq.s32.totalorder %s18, 1
      %p103 = por %p101, %p102
      %p104 = scmp.ne.s32.totalorder %s96, %s99
      %p105 = scmp.eq.s32.totalorder %s18, 0
      %p106 = por %p104, %p105
      %p107 = scmp.ne.s32.totalorder %s96, %s99
      %p108 = scmp.eq.s32.totalorder %s23, 1
      %p109 = por %p107, %p108
      %p110 = scmp.ne.s32.totalorder %s99, %s100
      %p111 = scmp.eq.s32.totalorder %s23, 0
      %p112 = por %p110, %p111
      %p113 = scmp.ne.s32.totalorder %s99, %s100
      %p114 = scmp.eq.s32.totalorder %s24, 1
      %p115 = por %p113, %p114
      %p117 = scmp.ne.s32.totalorder %s100, %s116
      %p118 = scmp.eq.s32.totalorder %s24, 0
      %p119 = por %p117, %p118
      %s120 = ssub.s32 %s18, %s25
      %p121 = scmp.eq.s32.totalorder %s120, 0
      %s123 = sadd.s32 %s122, 1
      %s124 = scalar_select %p121, %s122, %s123
      %p127 = pneg %p121
      %p128 = scmp.eq.s32.totalorder %s18, 1
      %p129 = por %p127, %p128
      %p130 = scmp.ne.s32.totalorder %s122, %s125
      %p131 = scmp.eq.s32.totalorder %s18, 0
      %p132 = por %p130, %p131
      %p133 = scmp.ne.s32.totalorder %s122, %s125
      %p134 = scmp.eq.s32.totalorder %s23, 1
      %p135 = por %p133, %p134
      %p136 = scmp.ne.s32.totalorder %s125, %s126
      %p137 = scmp.eq.s32.totalorder %s23, 0
      %p138 = por %p136, %p137
      %p139 = scmp.ne.s32.totalorder %s125, %s126
      %p140 = scmp.eq.s32.totalorder %s24, 1
      %p141 = por %p139, %p140
      %p143 = scmp.ne.s32.totalorder %s126, %s142
      %p144 = scmp.eq.s32.totalorder %s24, 0
      %p145 = por %p143, %p144
      %p146 = scmp.le.s32.totalorder 1, %s18
      %p147 = scmp.lt.s32.totalorder %s18, 3
      %p148 = pnand %p146, %p147
      %p149 = pneg %p148
      // Predicated region
      $region9: #{tpu_custom_call.1} parent=5 // pred_check
        _
      $region10: #{tpu_custom_call.1} parent=5 // pred_check_branch
        %151 = sbr.rel (%p148) target = $region12
      $region11: #{tpu_custom_call.1} parent=5 // pred_region
        %s152 = ssub.s32 %s18, 1
        // Predicated region
        $region13: #{tpu_custom_call.1} parent=11 // pred_check
          %p153 = pneg %p65
        $region14: #{tpu_custom_call.1} parent=11 // pred_check_branch
          %155 = sbr.rel (%p153) target = $region16
        $region15: #{tpu_custom_call.1} parent=11 // pred_region
          %157 = vsyncadd [#allocation3], 0
          %s158 = sshll.u32 %s1, 4
          %s159 = int_to_ptr.hbm [resolvable:$true] %s158
          %s160 = sshll.u32 [#allocation2], 4
          %s161 = int_to_ptr.vmem [resolvable:$true] %s160
          %166 = dma.hbm_to_vmem [thread:$0]  %s159, 1024, %s161, [#allocation3], 128, 128, 8
        $region16: #{tpu_custom_call.1} parent=11 // pred_fallthru
          _
        // Predicated region
        $region17: #{tpu_custom_call.1} parent=11 // pred_check
          %p167 = pneg %p86
        $region18: #{tpu_custom_call.1} parent=11 // pred_check_branch
          %169 = sbr.rel (%p167) target = $region20
        $region19: #{tpu_custom_call.1} parent=11 // pred_region
          _
        $region20: #{tpu_custom_call.1} parent=11 // pred_fallthru
          _
      $region12: #{tpu_custom_call.1} parent=5 // pred_fallthru
        _
      %p170 = scmp.lt.s32.totalorder %s18, 2
      // Predicated region
      $region21: #{tpu_custom_call.1} parent=5 // pred_check
        %p171 = pneg %p170
      $region22: #{tpu_custom_call.1} parent=5 // pred_check_branch
        %173 = sbr.rel (%p171) target = $region24
      $region23: #{tpu_custom_call.1} parent=5 // pred_region
        // Predicated region
        $region25: #{tpu_custom_call.1} parent=23 // pred_check
          %p174 = pneg %p38
        $region26: #{tpu_custom_call.1} parent=23 // pred_check_branch
          %176 = sbr.rel (%p174) target = $region28
        $region27: #{tpu_custom_call.1} parent=23 // pred_region
          %p177 = scmp.lt.s32.totalorder %s18, 1
          %s178 = scalar_select %p177, %s18, 1
          %s179 = smul.addr %s178, 8
          %s180 = scalar_lea.vmem %s0, %s179
        $region28: #{tpu_custom_call.1} parent=23 // pred_fallthru
          _
      $region24: #{tpu_custom_call.1} parent=5 // pred_fallthru
        _
      %p181 = scmp.le.s32.totalorder 1, %s18
      %p182 = scmp.lt.s32.totalorder %s18, 3
      %p183 = pnand %p181, %p182
      %p184 = pneg %p183
      // Predicated region
      $region29: #{tpu_custom_call.1} parent=5 // pred_check
        _
      $region30: #{tpu_custom_call.1} parent=5 // pred_check_branch
        %186 = sbr.rel (%p183) target = $region32
      $region31: #{tpu_custom_call.1} parent=5 // pred_region
        %s187 = ssub.s32 %s18, 1
        // Predicated region
        $region33: #{tpu_custom_call.1} parent=31 // pred_check
          %p188 = pneg %p65
        $region34: #{tpu_custom_call.1} parent=31 // pred_check_branch
          %190 = sbr.rel (%p188) target = $region36
        $region35: #{tpu_custom_call.1} parent=31 // pred_region
          %192 = dma.done [#allocation3], 1024
        $region36: #{tpu_custom_call.1} parent=31 // pred_fallthru
          _
        %p193 = scmp.lt.s32.totalorder %s23, 1
        %s194 = scalar_select %p193, %s23, 1
        %s195 = smul.addr %s194, 8
        %s196 = scalar_lea.vmem %s0, %s195
        %p197 = pneg %p44
        %p198 = pneg %p41
        %p199 = pneg %p65
        %p200 = pneg %p62
        %p201 = pneg %p86
        %p202 = pneg %p83
        %p203 = pneg %p112
        %p204 = pneg %p109
        %s205 = sand.u32 %s99, 1
        %s206 = scalar_lea.sflag [#allocation4], %s205
        %s207 = sand.u32 %s99, 1
        %s208 = smul.addr %s207, 8
        %s209 = scalar_lea.vmem [#allocation5], %s208
        %p210 = pneg %p138
        %p211 = pneg %p135
        %s212 = sand.u32 %s125, 1
        %s213 = scalar_lea.sflag [#allocation7], %s212
        %s214 = sand.u32 %s125, 1
        %s215 = smul.addr %s214, 8
        %s216 = scalar_lea.vmem [#allocation6], %s215
        %p217 = scmp.lt.s32.totalorder %s23, 1
        %s218 = scalar_select %p217, %s23, 1
        %s219 = smul.addr %s218, 8
        %s220 = scalar_lea.vmem %s0, %s219
        %v221 = vld [vmem:[%s220] sm:$0xff]
        %v222 = vlaneseq
        %v223 = vand.u32 %v222, 127
        %224 = vset.pattern.permute.xlu0 0
        %225 = vperm.xlu0 %224, %v221
        %v226 = vpop.permute.xlu0 %225
        %vm227 = vcmp.eq.s32.totalorder %v226, %v223
        %v228 = vsel %vm227, 1, 0
        %v229 = vcvt.s32.f32 %v228
        %v230 = vld [vmem:[#allocation2] sm:$0xff]
        %v231 = vld [vmem:[#allocation2 + $0x8] sm:$0xff]
        %v232 = vld [vmem:[#allocation2 + $0x10] sm:$0xff]
        %v233 = vld [vmem:[#allocation2 + $0x18] sm:$0xff]
        %v234 = vld [vmem:[#allocation2 + $0x20] sm:$0xff]
        %v235 = vld [vmem:[#allocation2 + $0x28] sm:$0xff]
        %v236 = vld [vmem:[#allocation2 + $0x30] sm:$0xff]
        %v237 = vld [vmem:[#allocation2 + $0x38] sm:$0xff]
        %vm238 = vcmask 523264
        %v240 = vsel %vm238, %v229, 0
        %242 = vmatpush.msra.mxu0 0.0
        %243 = vmatpush.msra.mxu0 0.0
        %244 = vmatpush.msra.mxu0 0.0
        %245 = vmatpush.msra.mxu0 0.0
        %246 = vmatpush.msra.mxu0 0.0
        %247 = vmatpush.msra.mxu0 0.0
        %248 = vmatpush.msra.mxu0 0.0
        %249 = vmatpush.msra.mxu0 0.0
        %250 = vmatpush.msra.mxu0 %v237
        %251 = vmatpush.msra.mxu0 %v236
        %252 = vmatpush.msra.mxu0 %v235
        %253 = vmatpush.msra.mxu0 %v234
        %254 = vmatpush.msra.mxu0 %v233
        %255 = vmatpush.msra.mxu0 %v232
        %256 = vmatpush.msra.mxu0 %v231
        %257 = vmatpush.msra.mxu0 %v230
        %258 = vmatmul.f32.gmra.mxu0 %v240
        %v259 = vpop.f32.mrf.mxu0
        %v260 = vadd.f32 0.0, %v259
        %261 = vdwg.mxu0
        %vm262 = vcmp.ne.s32.totalorder %v221, 0
        %v263 = vld [vmem:[%s2] sm:$0xff]
        %v264 = vsel %vm262, 1, 0
        %265 = vset.pattern.permute.xlu0 0
        %266 = vperm.xlu0 %265, %v264
        %v267 = vpop.permute.xlu0 %266
        %vm268 = vcmp.eq.s32.totalorder %v267, 1
        %v269 = vsel %vm268, %v263, 0.0
        %v270 = vmul.f32 %v260, 11.313708
        %v271 = vadd.f32 %v270, %v269
        %272 = vst [vmem:[%s209] sm:$0xff] %v260
        %273 = vst [vmem:[%s216] sm:$0xff] %v271
        %s274 = sand.u32 %s99, 1
        %s275 = scalar_lea.sflag [#allocation4], %s274
        %s276 = sand.u32 %s99, 1
        %s277 = smul.addr %s276, 8
        %s278 = scalar_lea.vmem [#allocation5], %s277
        %s279 = sand.u32 %s125, 1
        %s280 = scalar_lea.sflag [#allocation7], %s279
        %s281 = sand.u32 %s125, 1
        %s282 = smul.addr %s281, 8
        %s283 = scalar_lea.vmem [#allocation6], %s282
        // Predicated region
        $region37: #{tpu_custom_call.1} parent=31 // pred_check
          %p284 = pneg %p109
        $region38: #{tpu_custom_call.1} parent=31 // pred_check_branch
          %286 = sbr.rel (%p284) target = $region40
        $region39: #{tpu_custom_call.1} parent=31 // pred_region
          %288 = vsyncadd %s275, 0
          %s289 = smul.addr %s23, 8
          %s290 = scalar_lea.hbm %s3, %s289
          %s292 = sshll.u32 %s278, 4
          %s293 = int_to_ptr.vmem [resolvable:$true] %s292
          %s294 = sshll.u32 %s290, 4
          %s295 = int_to_ptr.hbm [resolvable:$true] %s294
          %297 = dma.vmem_to_hbm [thread:$0]  %s293, 128, %s295, %s275
        $region40: #{tpu_custom_call.1} parent=31 // pred_fallthru
          _
        // Predicated region
        $region41: #{tpu_custom_call.1} parent=31 // pred_check
          %p298 = pneg %p135
        $region42: #{tpu_custom_call.1} parent=31 // pred_check_branch
          %300 = sbr.rel (%p298) target = $region44
        $region43: #{tpu_custom_call.1} parent=31 // pred_region
          %302 = vsyncadd %s280, 0
          %s303 = smul.addr %s23, 8
          %s304 = scalar_lea.hbm %s4, %s303
          %s306 = sshll.u32 %s283, 4
          %s307 = int_to_ptr.vmem [resolvable:$true] %s306
          %s308 = sshll.u32 %s304, 4
          %s309 = int_to_ptr.hbm [resolvable:$true] %s308
          %311 = dma.vmem_to_hbm [thread:$0]  %s307, 128, %s309, %s280
        $region44: #{tpu_custom_call.1} parent=31 // pred_fallthru
          _
      $region32: #{tpu_custom_call.1} parent=5 // pred_fallthru
        _
      %p312 = scmp.le.s32.totalorder 2, %s18
      // Predicated region
      $region45: #{tpu_custom_call.1} parent=5 // pred_check
        %p313 = pneg %p312
      $region46: #{tpu_custom_call.1} parent=5 // pred_check_branch
        %315 = sbr.rel (%p313) target = $region48
      $region47: #{tpu_custom_call.1} parent=5 // pred_region
        %s316 = ssub.s32 %s18, 2
        // Predicated region
        $region49: #{tpu_custom_call.1} parent=47 // pred_check
          %p317 = pneg %p115
        $region50: #{tpu_custom_call.1} parent=47 // pred_check_branch
          %319 = sbr.rel (%p317) target = $region52
        $region51: #{tpu_custom_call.1} parent=47 // pred_region
          %s320 = sand.u32 %s100, 1
          %s321 = scalar_lea.sflag [#allocation4], %s320
          %s322 = sand.u32 %s100, 1
          %s323 = smul.addr %s322, 8
          %s324 = scalar_lea.vmem [#allocation5], %s323
          %326 = dma.done %s321, 128
        $region52: #{tpu_custom_call.1} parent=47 // pred_fallthru
          _
        // Predicated region
        $region53: #{tpu_custom_call.1} parent=47 // pred_check
          %p327 = pneg %p141
        $region54: #{tpu_custom_call.1} parent=47 // pred_check_branch
          %329 = sbr.rel (%p327) target = $region56
        $region55: #{tpu_custom_call.1} parent=47 // pred_region
          %s330 = sand.u32 %s126, 1
          %s331 = scalar_lea.sflag [#allocation7], %s330
          %s332 = sand.u32 %s126, 1
          %s333 = smul.addr %s332, 8
          %s334 = scalar_lea.vmem [#allocation6], %s333
          %336 = dma.done %s331, 128
        $region56: #{tpu_custom_call.1} parent=47 // pred_fallthru
          _
      $region48: #{tpu_custom_call.1} parent=5 // pred_fallthru
        _
    $region6: #{tpu_custom_call.1} parent=1 // loop_footer
      %s22 = sadd.s32 1, %s18
    $region7: #{tpu_custom_call.1} parent=1 // loop_footer_branch
      %17 = sbr.rel target = $region3
    $region8: #{tpu_custom_call.1} parent=1 // loop_exit
      _
    %337 = vsyncpa [#allocation3], 1
    %s338 = scalar_lea.sflag [#allocation3], 1
    %339 = vsyncpa %s338, 1
    %340 = vsyncpa [#allocation4], 1
    %s341 = scalar_lea.sflag [#allocation4], 1
    %342 = vsyncpa %s341, 1
    %343 = vsyncpa [#allocation7], 1
    %s344 = scalar_lea.sflag [#allocation7], 1
    %345 = vsyncpa %s344, 1

</llo_original>
